<compile_context>
chip_gen: v6e
topology: v6e:2x2x1
jax: 0.10.0
libtpu: 0.0.40
codegen_flags: <defaults>
</compile_context>

<pallas_src>
import functools

import jax
import jax.numpy as jnp
from jax.experimental import pallas as pl
from jax.experimental.pallas import tpu as pltpu


def _swish(x):
    return x * jax.nn.sigmoid(x)


def _round_up(x, m):
    return ((x + m - 1) // m) * m


def _scale_up_kernel(xs_ref, w1_ref, w2_ref, w3_ref, w4_ref, o_ref, h_ref, *,
                     L, O_p, B_blk, PA,
                     K2, d2, P2, K3, d3, P3, K4, d4, P4):
    # Zero the causal left-pad lanes of the shared intermediate scratch with a
    # single aligned (O_p, PA) store.  Done unconditionally so the kernel stays
    # correct when the "parallel" batch axis is sharded across TensorCores.
    h_ref[:, :PA] = jnp.zeros((O_p, PA), jnp.float32)

    # Hoist the (tiny) weight loads out of the batch loop.
    w1 = w1_ref[...]          # (O_p, K1*Cin)
    w2 = w2_ref[...]          # (O_p, K2*O_p)
    w3 = w3_ref[...]          # (O_p, K3*O_p)
    w4 = w4_ref[...]          # (1,   K4*O_p)

    def stacked(P, d, K):
        # (K*O_p, L): tap-k slab reads h shifted by (k*d - P) lanes; the left
        # pad region of h_ref is zero, so out-of-range taps contribute nothing.
        return jnp.concatenate(
            [h_ref[:, PA - P + k * d: PA - P + k * d + L] for k in range(K)],
            axis=0)

    rows = []
    for b in range(B_blk):    # static unroll over the batch block
        # ---- conv1 (k=4, d=1; input pre-stacked host-side) + Swish ----------
        xs = xs_ref[b]                                         # (K1*Cin, L)
        h = _swish(jnp.dot(w1, xs, preferred_element_type=jnp.float32))
        h_ref[:, PA:] = h

        # ---- conv1_1 (k=4, d=2) + Swish: one matmul over stacked taps -------
        h = _swish(jnp.dot(w2, stacked(P2, d2, K2),
                           preferred_element_type=jnp.float32))
        h_ref[:, PA:] = h

        # ---- conv1_2 (k=4, d=4) + Swish --------------------------------------
        h = _swish(jnp.dot(w3, stacked(P3, d3, K3),
                           preferred_element_type=jnp.float32))
        h_ref[:, PA:] = h

        # ---- conv2 (k=16, d=1) + tanh: full 128-deep MXU contraction ---------
        rows.append(jnp.tanh(jnp.dot(w4, stacked(P4, d4, K4),
                                     preferred_element_type=jnp.float32)))

    # Lane-pack the B_blk results and store the whole block with one store.
    packed = jnp.concatenate(rows, axis=-1)                    # (1, B_blk*L)
    o_ref[...] = packed[None].astype(o_ref.dtype)              # (1, 1, B_blk*L)


def scale_up_pallas(x, w1, w2, w3, w4):
    """x: (N, Cin, L) f32.  w*: (O, I, K) f32 (PyTorch Conv1d weight layout,
    bias=False).  Returns (N, 1, L) f32."""
    N, Cin, L = x.shape
    O = w1.shape[0]
    K1, d1 = w1.shape[2], 1
    K2, d2 = w2.shape[2], 2
    K3, d3 = w3.shape[2], 4
    K4, d4 = w4.shape[2], 1
    P1 = (K1 - 1) * d1
    P2 = (K2 - 1) * d2
    P3 = (K3 - 1) * d3
    P4 = (K4 - 1) * d4

    # Pad hidden width to a multiple of 8 sublanes (f32 tile) so every stacked
    # per-tap slab is sublane-aligned.  Zero pads keep semantics (no bias).
    O_p = _round_up(O, 8)

    # --- host-side weight re-layout: one flat (out, K*in) matrix per layer ---
    def flat_w(w, in_pad, out_pad):
        o, i, k = w.shape
        w = jnp.pad(w, ((0, out_pad - o), (0, in_pad - i), (0, 0)))
        return jnp.transpose(w, (0, 2, 1)).reshape(out_pad, k * in_pad)

    w1f = flat_w(w1, Cin, O_p)            # (O_p, K1*Cin)
    w2f = flat_w(w2, O_p, O_p)            # (O_p, K2*O_p)
    w3f = flat_w(w3, O_p, O_p)            # (O_p, K3*O_p)
    w4f = flat_w(w4, O_p, 1)              # (1,   K4*O_p)  -- 128-deep

    # --- host-side im2col of the network input (layer-1 tap stacking) --------
    x_p = jnp.pad(x, ((0, 0), (0, 0), (P1, 0)))
    x_stack = jnp.concatenate(
        [x_p[:, :, k * d1: k * d1 + L] for k in range(K1)], axis=1)  # (N,K1*Cin,L)

    # --- batch blocking: amortize per-grid-step overhead, keep >=2 blocks ----
    B_blk = 8 if N >= 16 else max(1, N // 2)
    N_pad = _round_up(N, B_blk)
    if N_pad != N:
        x_stack = jnp.pad(x_stack, ((0, N_pad - N), (0, 0), (0, 0)))
    NB = N_pad // B_blk

    # Left pad of the shared intermediate scratch, rounded up to a lane tile so
    # the hot (O_p, L) activation store starts lane-aligned.
    PA = _round_up(max(P2, P3, P4), 128)

    kernel = functools.partial(
        _scale_up_kernel, L=L, O_p=O_p, B_blk=B_blk, PA=PA,
        K2=K2, d2=d2, P2=P2, K3=K3, d3=d3, P3=P3, K4=K4, d4=d4, P4=P4)

    out = pl.pallas_call(
        kernel,
        out_shape=jax.ShapeDtypeStruct((NB, 1, B_blk * L), x.dtype),
        grid_spec=pltpu.PrefetchScalarGridSpec(
            num_scalar_prefetch=0,
            grid=(NB,),
            in_specs=[
                pl.BlockSpec((B_blk, K1 * Cin, L), lambda i: (i, 0, 0)),
                pl.BlockSpec((O_p, K1 * Cin), lambda i: (0, 0)),
                pl.BlockSpec((O_p, K2 * O_p), lambda i: (0, 0)),
                pl.BlockSpec((O_p, K3 * O_p), lambda i: (0, 0)),
                pl.BlockSpec((1, K4 * O_p), lambda i: (0, 0)),
            ],
            out_specs=pl.BlockSpec((1, 1, B_blk * L), lambda i: (i, 0, 0)),
            scratch_shapes=[pltpu.VMEM((O_p, PA + L), jnp.float32)],
        ),
        compiler_params=pltpu.CompilerParams(
            dimension_semantics=("parallel",)),
    )(x_stack, w1f, w2f, w3f, w4f)

    # (NB, 1, B_blk*L) lane-packs B_blk consecutive batch rows; the reshape
    # back to (N, 1, L) is free layout plumbing.
    return out.reshape(N_pad, L)[:N].reshape(N, 1, L)


# ---------------------------- pure-JAX reference ----------------------------
def _ref_forward(x, w1, w2, w3, w4):
    def cconv(h, w, d):
        K = w.shape[2]
        pad = (K - 1) * d
        return jax.lax.conv_general_dilated(
            h, w, window_strides=(1,), padding=[(pad, 0)],
            rhs_dilation=(d,), dimension_numbers=('NCH', 'OIH', 'NCH'),
            precision=jax.lax.Precision.HIGHEST)
    h = _swish(cconv(x, w1, 1))
    h = _swish(cconv(h, w2, 2))
    h = _swish(cconv(h, w3, 4))
    return jnp.tanh(cconv(h, w4, 1))


if __name__ == "__main__":
    N, Cin, O, L = 2, 4, 8, 16

    key = jax.random.PRNGKey(0)
    kx, k1, k2, k3, k4 = jax.random.split(key, 5)

    x = jax.random.normal(kx, (N, Cin, L), jnp.float32)

    def init_w(k, o, i, ksz):
        scale = 1.0 / jnp.sqrt(jnp.float32(i * ksz))
        return scale * jax.random.normal(k, (o, i, ksz), jnp.float32)

    w1 = init_w(k1, O, Cin, 4)    # conv1:   k=4,  d=1
    w2 = init_w(k2, O, O, 4)      # conv1_1: k=4,  d=2
    w3 = init_w(k3, O, O, 4)      # conv1_2: k=4,  d=4
    w4 = init_w(k4, 1, O, 16)     # conv2:   k=16, d=1

    out = jax.jit(scale_up_pallas)(x, w1, w2, w3, w4)
    out = jax.block_until_ready(out)

    ref = _ref_forward(x, w1, w2, w3, w4)
    assert out.shape == (N, 1, L), out.shape
    assert jnp.allclose(out, ref, atol=1e-3, rtol=1e-3), \
        float(jnp.max(jnp.abs(out - ref)))

    print("KERNEL_OK")
</pallas_src>

<mosaic_0001>
module attributes {stable_mosaic.version = 11 : i64} {
  func.func @_scale_up_kernel(%arg0: i32, %arg1: memref<1x16x16xf32, #tpu.memory_space<vmem>>, %arg2: memref<8x16xf32, #tpu.memory_space<vmem>>, %arg3: memref<8x32xf32, #tpu.memory_space<vmem>>, %arg4: memref<8x32xf32, #tpu.memory_space<vmem>>, %arg5: memref<1x128xf32, #tpu.memory_space<vmem>>, %arg6: memref<1x1x16xf32, #tpu.memory_space<vmem>>, %arg7: memref<8x144xf32, #tpu.memory_space<vmem>>) attributes {dimension_semantics = [#tpu.dimension_semantics<parallel>], iteration_bounds = array<i64: 2>, scalar_prefetch = 0 : i64, scratch_operands = 1 : i64, tpu.core_type = #tpu.core_type<tc>, window_params = [{transform_indices = @transform_0, window_bounds = array<i64: 1, 16, 16>}, {pipeline_mode = #tpu.pipeline_mode<synchronous>, transform_indices = @transform_1, window_bounds = array<i64: 8, 16>}, {pipeline_mode = #tpu.pipeline_mode<synchronous>, transform_indices = @transform_2, window_bounds = array<i64: 8, 32>}, {pipeline_mode = #tpu.pipeline_mode<synchronous>, transform_indices = @transform_3, window_bounds = array<i64: 8, 32>}, {pipeline_mode = #tpu.pipeline_mode<synchronous>, transform_indices = @transform_4, window_bounds = array<i64: 1, 128>}, {transform_indices = @transform_5, window_bounds = array<i64: 1, 1, 16>}]} {
    %cst = arith.constant 0.000000e+00 : f32
    %0 = vector.broadcast %cst : f32 to vector<8x128xf32>
    %c0 = arith.constant 0 : index
    %c0_0 = arith.constant 0 : index
    %1 = vector.load %arg7[%c0, %c0_0] : memref<8x144xf32, #tpu.memory_space<vmem>>, vector<8x128xf32>
    tpu.vector_store %arg7[%c0, %c0_0], %0 {strides = array<i32>} : memref<8x144xf32, #tpu.memory_space<vmem>>, vector<8x128xf32>,
    %c0_1 = arith.constant 0 : index
    %c0_2 = arith.constant 0 : index
    %2 = vector.load %arg2[%c0_1, %c0_2] : memref<8x16xf32, #tpu.memory_space<vmem>>, vector<8x16xf32>
    %c0_3 = arith.constant 0 : index
    %c0_4 = arith.constant 0 : index
    %3 = vector.load %arg3[%c0_3, %c0_4] : memref<8x32xf32, #tpu.memory_space<vmem>>, vector<8x32xf32>
    %c0_5 = arith.constant 0 : index
    %c0_6 = arith.constant 0 : index
    %4 = vector.load %arg4[%c0_5, %c0_6] : memref<8x32xf32, #tpu.memory_space<vmem>>, vector<8x32xf32>
    %c0_7 = arith.constant 0 : index
    %c0_8 = arith.constant 0 : index
    %5 = vector.load %arg5[%c0_7, %c0_8] : memref<1x128xf32, #tpu.memory_space<vmem>>, vector<1x128xf32>
    %c0_9 = arith.constant 0 : index
    %c0_10 = arith.constant 0 : index
    %c0_11 = arith.constant 0 : index
    %6 = vector.load %arg1[%c0_9, %c0_10, %c0_11] : memref<1x16x16xf32, #tpu.memory_space<vmem>>, vector<1x16x16xf32>
    %7 = vector.shape_cast %6 : vector<1x16x16xf32> to vector<16x16xf32>
    %cst_12 = arith.constant dense<0.000000e+00> : vector<8x16xf32>
    %8 = tpu.matmul %2, %7, %cst_12 {dimension_numbers = #tpu.dot_dimension_numbers<[1], [0], [0], [1], [0, 0, 1, 1], [], []>} : vector<8x16xf32>, vector<16x16xf32>, vector<8x16xf32> -> vector<8x16xf32>
    %9 = arith.negf %8 : vector<8x16xf32>
    %10 = math.exp %9 : vector<8x16xf32>
    %cst_13 = arith.constant 1.000000e+00 : f32
    %11 = vector.broadcast %cst_13 : f32 to vector<8x16xf32>
    %12 = arith.addf %11, %10 : vector<8x16xf32>
    %13 = arith.divf %11, %12 : vector<8x16xf32>
    %14 = arith.mulf %8, %13 : vector<8x16xf32>
    %c0_14 = arith.constant 0 : index
    %c128 = arith.constant 128 : index
    %15 = vector.load %arg7[%c0_14, %c128] : memref<8x144xf32, #tpu.memory_space<vmem>>, vector<8x16xf32>
    tpu.vector_store %arg7[%c0_14, %c128], %14 {strides = array<i32>} : memref<8x144xf32, #tpu.memory_space<vmem>>, vector<8x16xf32>,
    %c0_15 = arith.constant 0 : index
    %c122 = arith.constant 122 : index
    %16 = vector.load %arg7[%c0_15, %c122] : memref<8x144xf32, #tpu.memory_space<vmem>>, vector<8x16xf32>
    %c0_16 = arith.constant 0 : index
    %c124 = arith.constant 124 : index
    %17 = vector.load %arg7[%c0_16, %c124] : memref<8x144xf32, #tpu.memory_space<vmem>>, vector<8x16xf32>
    %c0_17 = arith.constant 0 : index
    %c126 = arith.constant 126 : index
    %18 = vector.load %arg7[%c0_17, %c126] : memref<8x144xf32, #tpu.memory_space<vmem>>, vector<8x16xf32>
    %c0_18 = arith.constant 0 : index
    %c128_19 = arith.constant 128 : index
    %19 = vector.load %arg7[%c0_18, %c128_19] : memref<8x144xf32, #tpu.memory_space<vmem>>, vector<8x16xf32>
    %20 = tpu.concatenate %16, %17, %18, %19 in 0 : vector<8x16xf32>, vector<8x16xf32>, vector<8x16xf32>, vector<8x16xf32> -> vector<32x16xf32>
    %cst_20 = arith.constant dense<0.000000e+00> : vector<8x16xf32>
    %21 = tpu.matmul %3, %20, %cst_20 {dimension_numbers = #tpu.dot_dimension_numbers<[1], [0], [0], [1], [0, 0, 1, 1], [], []>} : vector<8x32xf32>, vector<32x16xf32>, vector<8x16xf32> -> vector<8x16xf32>
    %22 = arith.negf %21 : vector<8x16xf32>
    %23 = math.exp %22 : vector<8x16xf32>
    %cst_21 = arith.constant 1.000000e+00 : f32
    %24 = vector.broadcast %cst_21 : f32 to vector<8x16xf32>
    %25 = arith.addf %24, %23 : vector<8x16xf32>
    %26 = arith.divf %24, %25 : vector<8x16xf32>
    %27 = arith.mulf %21, %26 : vector<8x16xf32>
    %c0_22 = arith.constant 0 : index
    %c128_23 = arith.constant 128 : index
    %28 = vector.load %arg7[%c0_22, %c128_23] : memref<8x144xf32, #tpu.memory_space<vmem>>, vector<8x16xf32>
    tpu.vector_store %arg7[%c0_22, %c128_23], %27 {strides = array<i32>} : memref<8x144xf32, #tpu.memory_space<vmem>>, vector<8x16xf32>,
    %c0_24 = arith.constant 0 : index
    %c116 = arith.constant 116 : index
    %29 = vector.load %arg7[%c0_24, %c116] : memref<8x144xf32, #tpu.memory_space<vmem>>, vector<8x16xf32>
    %c0_25 = arith.constant 0 : index
    %c120 = arith.constant 120 : index
    %30 = vector.load %arg7[%c0_25, %c120] : memref<8x144xf32, #tpu.memory_space<vmem>>, vector<8x16xf32>
    %c0_26 = arith.constant 0 : index
    %c124_27 = arith.constant 124 : index
    %31 = vector.load %arg7[%c0_26, %c124_27] : memref<8x144xf32, #tpu.memory_space<vmem>>, vector<8x16xf32>
    %c0_28 = arith.constant 0 : index
    %c128_29 = arith.constant 128 : index
    %32 = vector.load %arg7[%c0_28, %c128_29] : memref<8x144xf32, #tpu.memory_space<vmem>>, vector<8x16xf32>
    %33 = tpu.concatenate %29, %30, %31, %32 in 0 : vector<8x16xf32>, vector<8x16xf32>, vector<8x16xf32>, vector<8x16xf32> -> vector<32x16xf32>
    %cst_30 = arith.constant dense<0.000000e+00> : vector<8x16xf32>
    %34 = tpu.matmul %4, %33, %cst_30 {dimension_numbers = #tpu.dot_dimension_numbers<[1], [0], [0], [1], [0, 0, 1, 1], [], []>} : vector<8x32xf32>, vector<32x16xf32>, vector<8x16xf32> -> vector<8x16xf32>
    %35 = arith.negf %34 : vector<8x16xf32>
    %36 = math.exp %35 : vector<8x16xf32>
    %cst_31 = arith.constant 1.000000e+00 : f32
    %37 = vector.broadcast %cst_31 : f32 to vector<8x16xf32>
    %38 = arith.addf %37, %36 : vector<8x16xf32>
    %39 = arith.divf %37, %38 : vector<8x16xf32>
    %40 = arith.mulf %34, %39 : vector<8x16xf32>
    %c0_32 = arith.constant 0 : index
    %c128_33 = arith.constant 128 : index
    %41 = vector.load %arg7[%c0_32, %c128_33] : memref<8x144xf32, #tpu.memory_space<vmem>>, vector<8x16xf32>
    tpu.vector_store %arg7[%c0_32, %c128_33], %40 {strides = array<i32>} : memref<8x144xf32, #tpu.memory_space<vmem>>, vector<8x16xf32>,
    %c0_34 = arith.constant 0 : index
    %c113 = arith.constant 113 : index
    %42 = vector.load %arg7[%c0_34, %c113] : memref<8x144xf32, #tpu.memory_space<vmem>>, vector<8x16xf32>
    %c0_35 = arith.constant 0 : index
    %c114 = arith.constant 114 : index
    %43 = vector.load %arg7[%c0_35, %c114] : memref<8x144xf32, #tpu.memory_space<vmem>>, vector<8x16xf32>
    %c0_36 = arith.constant 0 : index
    %c115 = arith.constant 115 : index
    %44 = vector.load %arg7[%c0_36, %c115] : memref<8x144xf32, #tpu.memory_space<vmem>>, vector<8x16xf32>
    %c0_37 = arith.constant 0 : index
    %c116_38 = arith.constant 116 : index
    %45 = vector.load %arg7[%c0_37, %c116_38] : memref<8x144xf32, #tpu.memory_space<vmem>>, vector<8x16xf32>
    %c0_39 = arith.constant 0 : index
    %c117 = arith.constant 117 : index
    %46 = vector.load %arg7[%c0_39, %c117] : memref<8x144xf32, #tpu.memory_space<vmem>>, vector<8x16xf32>
    %c0_40 = arith.constant 0 : index
    %c118 = arith.constant 118 : index
    %47 = vector.load %arg7[%c0_40, %c118] : memref<8x144xf32, #tpu.memory_space<vmem>>, vector<8x16xf32>
    %c0_41 = arith.constant 0 : index
    %c119 = arith.constant 119 : index
    %48 = vector.load %arg7[%c0_41, %c119] : memref<8x144xf32, #tpu.memory_space<vmem>>, vector<8x16xf32>
    %c0_42 = arith.constant 0 : index
    %c120_43 = arith.constant 120 : index
    %49 = vector.load %arg7[%c0_42, %c120_43] : memref<8x144xf32, #tpu.memory_space<vmem>>, vector<8x16xf32>
    %c0_44 = arith.constant 0 : index
    %c121 = arith.constant 121 : index
    %50 = vector.load %arg7[%c0_44, %c121] : memref<8x144xf32, #tpu.memory_space<vmem>>, vector<8x16xf32>
    %c0_45 = arith.constant 0 : index
    %c122_46 = arith.constant 122 : index
    %51 = vector.load %arg7[%c0_45, %c122_46] : memref<8x144xf32, #tpu.memory_space<vmem>>, vector<8x16xf32>
    %c0_47 = arith.constant 0 : index
    %c123 = arith.constant 123 : index
    %52 = vector.load %arg7[%c0_47, %c123] : memref<8x144xf32, #tpu.memory_space<vmem>>, vector<8x16xf32>
    %c0_48 = arith.constant 0 : index
    %c124_49 = arith.constant 124 : index
    %53 = vector.load %arg7[%c0_48, %c124_49] : memref<8x144xf32, #tpu.memory_space<vmem>>, vector<8x16xf32>
    %c0_50 = arith.constant 0 : index
    %c125 = arith.constant 125 : index
    %54 = vector.load %arg7[%c0_50, %c125] : memref<8x144xf32, #tpu.memory_space<vmem>>, vector<8x16xf32>
    %c0_51 = arith.constant 0 : index
    %c126_52 = arith.constant 126 : index
    %55 = vector.load %arg7[%c0_51, %c126_52] : memref<8x144xf32, #tpu.memory_space<vmem>>, vector<8x16xf32>
    %c0_53 = arith.constant 0 : index
    %c127 = arith.constant 127 : index
    %56 = vector.load %arg7[%c0_53, %c127] : memref<8x144xf32, #tpu.memory_space<vmem>>, vector<8x16xf32>
    %c0_54 = arith.constant 0 : index
    %c128_55 = arith.constant 128 : index
    %57 = vector.load %arg7[%c0_54, %c128_55] : memref<8x144xf32, #tpu.memory_space<vmem>>, vector<8x16xf32>
    %58 = tpu.concatenate %42, %43, %44, %45, %46, %47, %48, %49, %50, %51, %52, %53, %54, %55, %56, %57 in 0 : vector<8x16xf32>, vector<8x16xf32>, vector<8x16xf32>, vector<8x16xf32>, vector<8x16xf32>, vector<8x16xf32>, vector<8x16xf32>, vector<8x16xf32>, vector<8x16xf32>, vector<8x16xf32>, vector<8x16xf32>, vector<8x16xf32>, vector<8x16xf32>, vector<8x16xf32>, vector<8x16xf32>, vector<8x16xf32> -> vector<128x16xf32>
    %cst_56 = arith.constant dense<0.000000e+00> : vector<1x16xf32>
    %59 = tpu.matmul %5, %58, %cst_56 {dimension_numbers = #tpu.dot_dimension_numbers<[1], [0], [0], [1], [0, 0, 1, 1], [], []>} : vector<1x128xf32>, vector<128x16xf32>, vector<1x16xf32> -> vector<1x16xf32>
    %60 = math.tanh %59 : vector<1x16xf32>
    %61 = vector.shape_cast %60 : vector<1x16xf32> to vector<1x1x16xf32>
    %c0_57 = arith.constant 0 : index
    %c0_58 = arith.constant 0 : index
    %c0_59 = arith.constant 0 : index
    %62 = vector.load %arg6[%c0_57, %c0_58, %c0_59] : memref<1x1x16xf32, #tpu.memory_space<vmem>>, vector<1x1x16xf32>
    tpu.vector_store %arg6[%c0_57, %c0_58, %c0_59], %61 {strides = array<i32>} : memref<1x1x16xf32, #tpu.memory_space<vmem>>, vector<1x1x16xf32>,
    return
  }
  func.func @transform_0(%arg0: i32) -> (i32, i32, i32) {
    %c0_i32 = arith.constant 0 : i32
    %c0_i32_0 = arith.constant 0 : i32
    %c0_i32_1 = arith.constant 0 : i32
    return %arg0, %c0_i32, %c0_i32_0 : i32, i32, i32
  }
  func.func @transform_1(%arg0: i32) -> (i32, i32) {
    %c0_i32 = arith.constant 0 : i32
    %c0_i32_0 = arith.constant 0 : i32
    %c0_i32_1 = arith.constant 0 : i32
    return %c0_i32, %c0_i32_0 : i32, i32
  }
  func.func @transform_2(%arg0: i32) -> (i32, i32) {
    %c0_i32 = arith.constant 0 : i32
    %c0_i32_0 = arith.constant 0 : i32
    %c0_i32_1 = arith.constant 0 : i32
    return %c0_i32, %c0_i32_0 : i32, i32
  }
  func.func @transform_3(%arg0: i32) -> (i32, i32) {
    %c0_i32 = arith.constant 0 : i32
    %c0_i32_0 = arith.constant 0 : i32
    %c0_i32_1 = arith.constant 0 : i32
    return %c0_i32, %c0_i32_0 : i32, i32
  }
  func.func @transform_4(%arg0: i32) -> (i32, i32) {
    %c0_i32 = arith.constant 0 : i32
    %c0_i32_0 = arith.constant 0 : i32
    %c0_i32_1 = arith.constant 0 : i32
    return %c0_i32, %c0_i32_0 : i32, i32
  }
  func.func @transform_5(%arg0: i32) -> (i32, i32, i32) {
    %c0_i32 = arith.constant 0 : i32
    %c0_i32_0 = arith.constant 0 : i32
    %c0_i32_1 = arith.constant 0 : i32
    return %arg0, %c0_i32, %c0_i32_0 : i32, i32, i32
  }
}

</mosaic_0001>

<llo_original>
// kernel: scale_up_pallas.1
$region0: #{scale_up_pallas.1}
  #allocation0 [shape = 'u32[]', space=smem, size = 0x4, offset = 0x4, fixed_abs, tag = 'smem constant byte address 0x4 - core index']
  #allocation1 [shape = 'u32[144,128]{1,0:T(1,128)}', space=vmem, size = 0x12000, scoped, tag = 'internal scratch']
  #allocation2 [shape = 'f32[8,144]{1,0:T(8,128)}', space=vmem, size = 0x2000, scoped, tag = 'scratch operand']
  %s0 = inlined_call_operand.vmem [shape: f32[2,16,16], index: 0, kind: input, shape index: {}]
  %s1 = inlined_call_operand.vmem [shape: f32[8,16], index: 1, kind: input, shape index: {}]
  %s2 = inlined_call_operand.vmem [shape: f32[8,32], index: 2, kind: input, shape index: {}]
  %s3 = inlined_call_operand.vmem [shape: f32[8,32], index: 3, kind: input, shape index: {}]
  %s4 = inlined_call_operand.vmem [shape: f32[1,128], index: 4, kind: input, shape index: {}]
  %s5 = inlined_call_operand.hbm [shape: f32[2,1,16], index: 5, kind: output, shape index: {}]
  %s6 = sld [smem:[#allocation0]]
  $region53: #{scale_up_pallas.1} parent=0
    _
  %s8 = ssub.s32 1, %s6
  %s9 = scalar_select 0, %s8, %s6
  $region1: #{scale_up_pallas.1} parent=0
    #allocation3 [shape = 'u8[1024]{0}', space=vmem, size = 0x400, scoped, tag = 'output window, operand 0']
    #allocation4 [shape = 's32[2]{0}', space=sflag, size = 0x8, scoped, tag = 'scoped memory for scale_up_pallas.1']
    %10 = vsyncpa [#allocation4], 0
    %s11 = scalar_lea.sflag [#allocation4], 1
    %12 = vsyncpa %s11, 0
    loop: start=0, step=1, limit=4
    $region2: #{scale_up_pallas.1} parent=1 // loop_pre_header
      _
    $region3: #{scale_up_pallas.1} parent=1 // loop_header
      %s14 = sphi 0, %s18
      %p15 = scmp.ge.s32.totalorder %s14, 4
      %s24 = sphi 0, %s26
      %s27 = sphi 0, %s24
      %s28 = sphi 0, %s27
      %s44 = sphi 0, %s28
      %s48 = sphi 0, %s48
      %s50 = sphi 0, %s48
      %s51 = sphi 0, %s50
      %s65 = sphi 0, %s51
      %s69 = sphi 0, %s69
      %s71 = sphi 0, %s69
      %s72 = sphi 0, %s71
      %s86 = sphi 0, %s72
      %s90 = sphi 0, %s90
      %s92 = sphi 0, %s90
      %s93 = sphi 0, %s92
      %s107 = sphi 0, %s93
      %s111 = sphi 0, %s111
      %s113 = sphi 0, %s111
      %s114 = sphi 0, %s113
      %s128 = sphi 0, %s114
      %s134 = sphi 0, %s136
      %s137 = sphi 0, %s134
      %s138 = sphi 0, %s137
      %s154 = sphi 0, %s138
    $region4: #{scale_up_pallas.1} parent=1 // loop_header_branch
      %17 = sbr.rel (%p15) target = $region8
    $region5: #{scale_up_pallas.1} parent=1 // loop_body
      %s19 = ssub.s32 %s14, 1
      %s20 = ssub.s32 %s14, 2
      %s21 = sadd.s32 %s14, 1
      %s22 = ssub.s32 %s14, %s21
      %p23 = scmp.eq.s32.totalorder %s22, 0
      %s25 = sadd.s32 %s24, 1
      %s26 = scalar_select %p23, %s24, %s25
      %p29 = pneg %p23
      %p30 = scmp.eq.s32.totalorder %s14, 1
      %p31 = por %p29, %p30
      %p32 = scmp.ne.s32.totalorder %s24, %s27
      %p33 = scmp.eq.s32.totalorder %s14, 0
      %p34 = por %p32, %p33
      %p35 = scmp.ne.s32.totalorder %s24, %s27
      %p36 = scmp.eq.s32.totalorder %s19, 1
      %p37 = por %p35, %p36
      %p38 = scmp.ne.s32.totalorder %s27, %s28
      %p39 = scmp.eq.s32.totalorder %s19, 0
      %p40 = por %p38, %p39
      %p41 = scmp.ne.s32.totalorder %s27, %s28
      %p42 = scmp.eq.s32.totalorder %s20, 1
      %p43 = por %p41, %p42
      %p45 = scmp.ne.s32.totalorder %s28, %s44
      %p46 = scmp.eq.s32.totalorder %s20, 0
      %p47 = por %p45, %p46
      %s49 = sadd.s32 %s48, 1
      %p52 = scmp.eq.s32.totalorder %s14, 1
      %p53 = scmp.ne.s32.totalorder %s48, %s50
      %p54 = scmp.eq.s32.totalorder %s14, 0
      %p55 = por %p53, %p54
      %p56 = scmp.ne.s32.totalorder %s48, %s50
      %p57 = scmp.eq.s32.totalorder %s19, 1
      %p58 = por %p56, %p57
      %p59 = scmp.ne.s32.totalorder %s50, %s51
      %p60 = scmp.eq.s32.totalorder %s19, 0
      %p61 = por %p59, %p60
      %p62 = scmp.ne.s32.totalorder %s50, %s51
      %p63 = scmp.eq.s32.totalorder %s20, 1
      %p64 = por %p62, %p63
      %p66 = scmp.ne.s32.totalorder %s51, %s65
      %p67 = scmp.eq.s32.totalorder %s20, 0
      %p68 = por %p66, %p67
      %s70 = sadd.s32 %s69, 1
      %p73 = scmp.eq.s32.totalorder %s14, 1
      %p74 = scmp.ne.s32.totalorder %s69, %s71
      %p75 = scmp.eq.s32.totalorder %s14, 0
      %p76 = por %p74, %p75
      %p77 = scmp.ne.s32.totalorder %s69, %s71
      %p78 = scmp.eq.s32.totalorder %s19, 1
      %p79 = por %p77, %p78
      %p80 = scmp.ne.s32.totalorder %s71, %s72
      %p81 = scmp.eq.s32.totalorder %s19, 0
      %p82 = por %p80, %p81
      %p83 = scmp.ne.s32.totalorder %s71, %s72
      %p84 = scmp.eq.s32.totalorder %s20, 1
      %p85 = por %p83, %p84
      %p87 = scmp.ne.s32.totalorder %s72, %s86
      %p88 = scmp.eq.s32.totalorder %s20, 0
      %p89 = por %p87, %p88
      %s91 = sadd.s32 %s90, 1
      %p94 = scmp.eq.s32.totalorder %s14, 1
      %p95 = scmp.ne.s32.totalorder %s90, %s92
      %p96 = scmp.eq.s32.totalorder %s14, 0
      %p97 = por %p95, %p96
      %p98 = scmp.ne.s32.totalorder %s90, %s92
      %p99 = scmp.eq.s32.totalorder %s19, 1
      %p100 = por %p98, %p99
      %p101 = scmp.ne.s32.totalorder %s92, %s93
      %p102 = scmp.eq.s32.totalorder %s19, 0
      %p103 = por %p101, %p102
      %p104 = scmp.ne.s32.totalorder %s92, %s93
      %p105 = scmp.eq.s32.totalorder %s20, 1
      %p106 = por %p104, %p105
      %p108 = scmp.ne.s32.totalorder %s93, %s107
      %p109 = scmp.eq.s32.totalorder %s20, 0
      %p110 = por %p108, %p109
      %s112 = sadd.s32 %s111, 1
      %p115 = scmp.eq.s32.totalorder %s14, 1
      %p116 = scmp.ne.s32.totalorder %s111, %s113
      %p117 = scmp.eq.s32.totalorder %s14, 0
      %p118 = por %p116, %p117
      %p119 = scmp.ne.s32.totalorder %s111, %s113
      %p120 = scmp.eq.s32.totalorder %s19, 1
      %p121 = por %p119, %p120
      %p122 = scmp.ne.s32.totalorder %s113, %s114
      %p123 = scmp.eq.s32.totalorder %s19, 0
      %p124 = por %p122, %p123
      %p125 = scmp.ne.s32.totalorder %s113, %s114
      %p126 = scmp.eq.s32.totalorder %s20, 1
      %p127 = por %p125, %p126
      %p129 = scmp.ne.s32.totalorder %s114, %s128
      %p130 = scmp.eq.s32.totalorder %s20, 0
      %p131 = por %p129, %p130
      %s132 = ssub.s32 %s14, %s21
      %p133 = scmp.eq.s32.totalorder %s132, 0
      %s135 = sadd.s32 %s134, 1
      %s136 = scalar_select %p133, %s134, %s135
      %p139 = pneg %p133
      %p140 = scmp.eq.s32.totalorder %s14, 1
      %p141 = por %p139, %p140
      %p142 = scmp.ne.s32.totalorder %s134, %s137
      %p143 = scmp.eq.s32.totalorder %s14, 0
      %p144 = por %p142, %p143
      %p145 = scmp.ne.s32.totalorder %s134, %s137
      %p146 = scmp.eq.s32.totalorder %s19, 1
      %p147 = por %p145, %p146
      %p148 = scmp.ne.s32.totalorder %s137, %s138
      %p149 = scmp.eq.s32.totalorder %s19, 0
      %p150 = por %p148, %p149
      %p151 = scmp.ne.s32.totalorder %s137, %s138
      %p152 = scmp.eq.s32.totalorder %s20, 1
      %p153 = por %p151, %p152
      %p155 = scmp.ne.s32.totalorder %s138, %s154
      %p156 = scmp.eq.s32.totalorder %s20, 0
      %p157 = por %p155, %p156
      %p158 = scmp.le.s32.totalorder 1, %s14
      %p159 = scmp.lt.s32.totalorder %s14, 3
      %p160 = pnand %p158, %p159
      %p161 = pneg %p160
      // Predicated region
      $region9: #{scale_up_pallas.1} parent=5 // pred_check
        _
      $region10: #{scale_up_pallas.1} parent=5 // pred_check_branch
        %163 = sbr.rel (%p160) target = $region12
      $region11: #{scale_up_pallas.1} parent=5 // pred_region
        %s164 = ssub.s32 %s14, 1
        // Predicated region
        $region13: #{scale_up_pallas.1} parent=11 // pred_check
          %p165 = pneg %p61
        $region14: #{scale_up_pallas.1} parent=11 // pred_check_branch
          %167 = sbr.rel (%p165) target = $region16
        $region15: #{scale_up_pallas.1} parent=11 // pred_region
          _
        $region16: #{scale_up_pallas.1} parent=11 // pred_fallthru
          _
        // Predicated region
        $region17: #{scale_up_pallas.1} parent=11 // pred_check
          %p168 = pneg %p82
        $region18: #{scale_up_pallas.1} parent=11 // pred_check_branch
          %170 = sbr.rel (%p168) target = $region20
        $region19: #{scale_up_pallas.1} parent=11 // pred_region
          _
        $region20: #{scale_up_pallas.1} parent=11 // pred_fallthru
          _
        // Predicated region
        $region21: #{scale_up_pallas.1} parent=11 // pred_check
          %p171 = pneg %p103
        $region22: #{scale_up_pallas.1} parent=11 // pred_check_branch
          %173 = sbr.rel (%p171) target = $region24
        $region23: #{scale_up_pallas.1} parent=11 // pred_region
          _
        $region24: #{scale_up_pallas.1} parent=11 // pred_fallthru
          _
        // Predicated region
        $region25: #{scale_up_pallas.1} parent=11 // pred_check
          %p174 = pneg %p124
        $region26: #{scale_up_pallas.1} parent=11 // pred_check_branch
          %176 = sbr.rel (%p174) target = $region28
        $region27: #{scale_up_pallas.1} parent=11 // pred_region
          _
        $region28: #{scale_up_pallas.1} parent=11 // pred_fallthru
          _
      $region12: #{scale_up_pallas.1} parent=5 // pred_fallthru
        _
      %p177 = scmp.lt.s32.totalorder %s14, 2
      // Predicated region
      $region29: #{scale_up_pallas.1} parent=5 // pred_check
        %p178 = pneg %p177
      $region30: #{scale_up_pallas.1} parent=5 // pred_check_branch
        %180 = sbr.rel (%p178) target = $region32
      $region31: #{scale_up_pallas.1} parent=5 // pred_region
        // Predicated region
        $region33: #{scale_up_pallas.1} parent=31 // pred_check
          %p181 = pneg %p34
        $region34: #{scale_up_pallas.1} parent=31 // pred_check_branch
          %183 = sbr.rel (%p181) target = $region36
        $region35: #{scale_up_pallas.1} parent=31 // pred_region
          %p184 = scmp.lt.s32.totalorder %s14, 1
          %s185 = scalar_select %p184, %s14, 1
          %s186 = smul.addr %s185, 2
          %s187 = smul.addr %s186, 8
          %s188 = scalar_lea.vmem %s0, %s187
        $region36: #{scale_up_pallas.1} parent=31 // pred_fallthru
          _
      $region32: #{scale_up_pallas.1} parent=5 // pred_fallthru
        _
      %p189 = scmp.le.s32.totalorder 1, %s14
      %p190 = scmp.lt.s32.totalorder %s14, 3
      %p191 = pnand %p189, %p190
      %p192 = pneg %p191
      // Predicated region
      $region37: #{scale_up_pallas.1} parent=5 // pred_check
        _
      $region38: #{scale_up_pallas.1} parent=5 // pred_check_branch
        %194 = sbr.rel (%p191) target = $region40
      $region39: #{scale_up_pallas.1} parent=5 // pred_region
        %s195 = ssub.s32 %s14, 1
        %p196 = scmp.lt.s32.totalorder %s19, 1
        %s197 = scalar_select %p196, %s19, 1
        %s198 = smul.addr %s197, 2
        %s199 = smul.addr %s198, 8
        %s200 = scalar_lea.vmem %s0, %s199
        %p201 = pneg %p40
        %p202 = pneg %p37
        %p203 = pneg %p61
        %p204 = pneg %p58
        %p205 = pneg %p82
        %p206 = pneg %p79
        %p207 = pneg %p103
        %p208 = pneg %p100
        %p209 = pneg %p124
        %p210 = pneg %p121
        %p211 = pneg %p150
        %p212 = pneg %p147
        %s213 = sand.u32 %s137, 1
        %s214 = scalar_lea.sflag [#allocation4], %s213
        %s215 = sand.u32 %s137, 1
        %s216 = scalar_lea.vmem [#allocation3], %s215
        %p217 = scmp.lt.s32.totalorder %s19, 1
        %s218 = scalar_select %p217, %s19, 1
        %s219 = smul.addr %s218, 2
        %s220 = smul.addr %s219, 8
        %s221 = scalar_lea.vmem %s0, %s220
        %222 = vst [vmem:[#allocation2] sm:$0xff] 0.0
        %v223 = vld [vmem:[%s1] sm:$0xff]
        %v224 = vld [vmem:[%s2] sm:$0xff]
        %v225 = vld [vmem:[%s3] sm:$0xff]
        %v226 = vld [vmem:[%s4] sm:$0x1]
        %v227 = vld [vmem:[%s221] sm:$0xff]
        %v228 = vld [vmem:[%s221 + $0x8] sm:$0xff]
        %vm229 = vcmask 130048
        %v231 = vsel %vm229, %v223, 0
        %233 = vmatprep.subr.mxu0 0.0
        %234 = vmatpush1.msra.mxu0 0.0
        %235 = vmatprep.subr.mxu0 0.0
        %236 = vmatpush1.msra.mxu0 0.0
        %237 = vmatprep.subr.mxu0 0.0
        %238 = vmatpush1.msra.mxu0 0.0
        %239 = vmatprep.subr.mxu0 0.0
        %240 = vmatpush1.msra.mxu0 0.0
        %241 = vmatprep.subr.mxu0 0.0
        %242 = vmatpush1.msra.mxu0 0.0
        %243 = vmatprep.subr.mxu0 0.0
        %244 = vmatpush1.msra.mxu0 0.0
        %245 = vmatprep.subr.mxu0 0.0
        %246 = vmatpush1.msra.mxu0 0.0
        %247 = vmatprep.subr.mxu0 0.0
        %248 = vmatpush1.msra.mxu0 0.0
        %249 = vmatprep.subr.mxu0 0.0
        %250 = vmatpush1.msra.mxu0 0.0
        %251 = vmatprep.subr.mxu0 0.0
        %252 = vmatpush1.msra.mxu0 0.0
        %253 = vmatprep.subr.mxu0 0.0
        %254 = vmatpush1.msra.mxu0 0.0
        %255 = vmatprep.subr.mxu0 0.0
        %256 = vmatpush1.msra.mxu0 0.0
        %257 = vmatprep.subr.mxu0 0.0
        %258 = vmatpush1.msra.mxu0 0.0
        %259 = vmatprep.subr.mxu0 0.0
        %260 = vmatpush1.msra.mxu0 0.0
        %261 = vmatprep.subr.mxu0 0.0
        %262 = vmatpush1.msra.mxu0 %v228
        %263 = vmatprep.subr.mxu0 0.0
        %264 = vmatpush1.msra.mxu0 %v227
        %265 = vmatprep.subr.mxu0 0.0
        %266 = vmatpush2.msra.mxu0 0.0
        %267 = vmatprep.subr.mxu0 0.0
        %268 = vmatpush2.msra.mxu0 0.0
        %269 = vmatprep.subr.mxu0 0.0
        %270 = vmatpush2.msra.mxu0 0.0
        %271 = vmatprep.subr.mxu0 0.0
        %272 = vmatpush2.msra.mxu0 0.0
        %273 = vmatprep.subr.mxu0 0.0
        %274 = vmatpush2.msra.mxu0 0.0
        %275 = vmatprep.subr.mxu0 0.0
        %276 = vmatpush2.msra.mxu0 0.0
        %277 = vmatprep.subr.mxu0 0.0
        %278 = vmatpush2.msra.mxu0 0.0
        %279 = vmatprep.subr.mxu0 0.0
        %280 = vmatpush2.msra.mxu0 0.0
        %281 = vmatprep.subr.mxu0 0.0
        %282 = vmatpush2.msra.mxu0 0.0
        %283 = vmatprep.subr.mxu0 0.0
        %284 = vmatpush2.msra.mxu0 0.0
        %285 = vmatprep.subr.mxu0 0.0
        %286 = vmatpush2.msra.mxu0 0.0
        %287 = vmatprep.subr.mxu0 0.0
        %288 = vmatpush2.msra.mxu0 0.0
        %289 = vmatprep.subr.mxu0 0.0
        %290 = vmatpush2.msra.mxu0 0.0
        %291 = vmatprep.subr.mxu0 0.0
        %292 = vmatpush2.msra.mxu0 0.0
        %293 = vmatprep.subr.mxu0 0.0
        %294 = vmatpush2.msra.mxu0 0.0
        %295 = vmatprep.subr.mxu0 0.0
        %296 = vmatpush2.msra.mxu0 0.0
        %297 = vmatprep.mubr.f32.mxu0 0.0
        %298 = vmatmul.mubr.f32.gmra.mxu0 %v231
        %v299 = vpop.f32.mrf.mxu0
        %v300 = vadd.f32 0.0, %v299
        %v301 = vpop.f32.mrf.mxu0
        %302 = vdwg.mxu0
        %v303 = vxor.u32 %v300, 2147483648
        %v304 = vmul.f32 %v303, 1.442695
        %v305 = vpow.pop %v304
        %v306 = vadd.f32 %v305, 1.0
        %v307 = vrcp.pop %v306
        %v308 = vmul.f32 1.0, %v307
        %v309 = vmul.f32 %v300, %v308
        %310 = vst.msk [vmem:[#allocation2 + $0x8] sm:$0xff] %vm229, %v309
        %v311 = vld [vmem:[#allocation2] sm:$0xff]
        %v312 = vld [vmem:[#allocation2 + $0x8] sm:$0xff]
        %315 = vrot.lane.b32.xlu0 %v311, 126
        %v316 = vpop.permute.xlu0 %315
        %317 = vrot.lane.b32.xlu0 %v312, 126
        %v318 = vpop.permute.xlu0 %317
        %vm319 = vcmask 1031168
        %v320 = vsel %vm319, %v316, %v318
        %321 = vrot.lane.b32.xlu0 %v311, 124
        %v322 = vpop.permute.xlu0 %321
        %323 = vrot.lane.b32.xlu0 %v312, 124
        %v324 = vpop.permute.xlu0 %323
        %vm325 = vcmask 1014784
        %v326 = vsel %vm325, %v322, %v324
        %327 = vrot.lane.b32.xlu0 %v312, 122
        %v328 = vpop.permute.xlu0 %327
        %329 = vrot.lane.b32.xlu0 %v311, 6
        %v330 = vpop.permute.xlu0 %329
        %331 = vrot.lane.b32.xlu0 %v312, 6
        %v332 = vpop.permute.xlu0 %331
        %333 = vrot.lane.b32.xlu0 %v320, 6
        %v334 = vpop.permute.xlu0 %333
        %335 = vrot.lane.b32.xlu0 %v318, 6
        %v336 = vpop.permute.xlu0 %335
        %337 = vrot.lane.b32.xlu0 %v326, 6
        %v338 = vpop.permute.xlu0 %337
        %339 = vrot.lane.b32.xlu0 %v324, 6
        %v340 = vpop.permute.xlu0 %339
        %341 = vrot.lane.b32.xlu0 %v328, 6
        %v342 = vpop.permute.xlu0 %341
        %vm343 = vcmask 48128
        %v344 = vsel %vm343, %v330, %v332
        %v345 = vsel %vm343, %v334, %v336
        %v346 = vsel %vm343, %v338, %v340
        %vm351 = vcmask 261120
        %v353 = vsel %vm351, %v224, 0
        %355 = vmatprep.subr.mxu0 0.0
        %356 = vmatpush1.msra.mxu0 0.0
        %357 = vmatprep.subr.mxu0 0.0
        %358 = vmatpush1.msra.mxu0 0.0
        %359 = vmatprep.subr.mxu0 0.0
        %360 = vmatpush1.msra.mxu0 0.0
        %361 = vmatprep.subr.mxu0 0.0
        %362 = vmatpush1.msra.mxu0 0.0
        %363 = vmatprep.subr.mxu0 0.0
        %364 = vmatpush1.msra.mxu0 0.0
        %365 = vmatprep.subr.mxu0 0.0
        %366 = vmatpush1.msra.mxu0 0.0
        %367 = vmatprep.subr.mxu0 0.0
        %368 = vmatpush1.msra.mxu0 0.0
        %369 = vmatprep.subr.mxu0 0.0
        %370 = vmatpush1.msra.mxu0 0.0
        %371 = vmatprep.subr.mxu0 0.0
        %372 = vmatpush1.msra.mxu0 0.0
        %373 = vmatprep.subr.mxu0 0.0
        %374 = vmatpush1.msra.mxu0 0.0
        %375 = vmatprep.subr.mxu0 0.0
        %376 = vmatpush1.msra.mxu0 0.0
        %377 = vmatprep.subr.mxu0 0.0
        %378 = vmatpush1.msra.mxu0 0.0
        %379 = vmatprep.subr.mxu0 0.0
        %380 = vmatpush1.msra.mxu0 %v342
        %381 = vmatprep.subr.mxu0 0.0
        %382 = vmatpush1.msra.mxu0 %v346
        %383 = vmatprep.subr.mxu0 0.0
        %384 = vmatpush1.msra.mxu0 %v345
        %385 = vmatprep.subr.mxu0 0.0
        %386 = vmatpush1.msra.mxu0 %v344
        %387 = vmatprep.subr.mxu0 0.0
        %388 = vmatpush2.msra.mxu0 0.0
        %389 = vmatprep.subr.mxu0 0.0
        %390 = vmatpush2.msra.mxu0 0.0
        %391 = vmatprep.subr.mxu0 0.0
        %392 = vmatpush2.msra.mxu0 0.0
        %393 = vmatprep.subr.mxu0 0.0
        %394 = vmatpush2.msra.mxu0 0.0
        %395 = vmatprep.subr.mxu0 0.0
        %396 = vmatpush2.msra.mxu0 0.0
        %397 = vmatprep.subr.mxu0 0.0
        %398 = vmatpush2.msra.mxu0 0.0
        %399 = vmatprep.subr.mxu0 0.0
        %400 = vmatpush2.msra.mxu0 0.0
        %401 = vmatprep.subr.mxu0 0.0
        %402 = vmatpush2.msra.mxu0 0.0
        %403 = vmatprep.subr.mxu0 0.0
        %404 = vmatpush2.msra.mxu0 0.0
        %405 = vmatprep.subr.mxu0 0.0
        %406 = vmatpush2.msra.mxu0 0.0
        %407 = vmatprep.subr.mxu0 0.0
        %408 = vmatpush2.msra.mxu0 0.0
        %409 = vmatprep.subr.mxu0 0.0
        %410 = vmatpush2.msra.mxu0 0.0
        %411 = vmatprep.subr.mxu0 0.0
        %412 = vmatpush2.msra.mxu0 0.0
        %413 = vmatprep.subr.mxu0 0.0
        %414 = vmatpush2.msra.mxu0 0.0
        %415 = vmatprep.subr.mxu0 0.0
        %416 = vmatpush2.msra.mxu0 0.0
        %417 = vmatprep.subr.mxu0 0.0
        %418 = vmatpush2.msra.mxu0 0.0
        %419 = vmatprep.mubr.f32.mxu0 0.0
        %420 = vmatmul.mubr.f32.gmra.mxu0 %v353
        %v421 = vpop.f32.mrf.mxu0
        %v422 = vadd.f32 0.0, %v421
        %v423 = vpop.f32.mrf.mxu0
        %424 = vdwg.mxu0
        %v425 = vxor.u32 %v422, 2147483648
        %v426 = vmul.f32 %v425, 1.442695
        %v427 = vpow.pop %v426
        %v428 = vadd.f32 %v427, 1.0
        %v429 = vrcp.pop %v428
        %v430 = vmul.f32 1.0, %v429
        %v431 = vmul.f32 %v422, %v430
        %432 = vst.msk [vmem:[#allocation2 + $0x8] sm:$0xff] %vm229, %v431
        %v433 = vld [vmem:[#allocation2] sm:$0xff]
        %v434 = vld [vmem:[#allocation2 + $0x8] sm:$0xff]
        %437 = vrot.lane.b32.xlu0 %v433, 124
        %v438 = vpop.permute.xlu0 %437
        %439 = vrot.lane.b32.xlu0 %v434, 124
        %v440 = vpop.permute.xlu0 %439
        %v441 = vsel %vm325, %v438, %v440
        %442 = vrot.lane.b32.xlu0 %v433, 120
        %v443 = vpop.permute.xlu0 %442
        %444 = vrot.lane.b32.xlu0 %v434, 120
        %v445 = vpop.permute.xlu0 %444
        %vm446 = vcmask 982016
        %v447 = vsel %vm446, %v443, %v445
        %448 = vrot.lane.b32.xlu0 %v434, 116
        %v449 = vpop.permute.xlu0 %448
        %450 = vrot.lane.b32.xlu0 %v433, 12
        %v451 = vpop.permute.xlu0 %450
        %452 = vrot.lane.b32.xlu0 %v434, 12
        %v453 = vpop.permute.xlu0 %452
        %454 = vrot.lane.b32.xlu0 %v441, 12
        %v455 = vpop.permute.xlu0 %454
        %456 = vrot.lane.b32.xlu0 %v440, 12
        %v457 = vpop.permute.xlu0 %456
        %458 = vrot.lane.b32.xlu0 %v447, 12
        %v459 = vpop.permute.xlu0 %458
        %460 = vrot.lane.b32.xlu0 %v445, 12
        %v461 = vpop.permute.xlu0 %460
        %462 = vrot.lane.b32.xlu0 %v449, 12
        %v463 = vpop.permute.xlu0 %462
        %vm464 = vcmask 97280
        %v465 = vsel %vm464, %v451, %v453
        %v466 = vsel %vm464, %v455, %v457
        %v467 = vsel %vm464, %v459, %v461
        %v473 = vsel %vm351, %v225, 0
        %475 = vmatprep.subr.mxu0 0.0
        %476 = vmatpush1.msra.mxu0 0.0
        %477 = vmatprep.subr.mxu0 0.0
        %478 = vmatpush1.msra.mxu0 0.0
        %479 = vmatprep.subr.mxu0 0.0
        %480 = vmatpush1.msra.mxu0 0.0
        %481 = vmatprep.subr.mxu0 0.0
        %482 = vmatpush1.msra.mxu0 0.0
        %483 = vmatprep.subr.mxu0 0.0
        %484 = vmatpush1.msra.mxu0 0.0
        %485 = vmatprep.subr.mxu0 0.0
        %486 = vmatpush1.msra.mxu0 0.0
        %487 = vmatprep.subr.mxu0 0.0
        %488 = vmatpush1.msra.mxu0 0.0
        %489 = vmatprep.subr.mxu0 0.0
        %490 = vmatpush1.msra.mxu0 0.0
        %491 = vmatprep.subr.mxu0 0.0
        %492 = vmatpush1.msra.mxu0 0.0
        %493 = vmatprep.subr.mxu0 0.0
        %494 = vmatpush1.msra.mxu0 0.0
        %495 = vmatprep.subr.mxu0 0.0
        %496 = vmatpush1.msra.mxu0 0.0
        %497 = vmatprep.subr.mxu0 0.0
        %498 = vmatpush1.msra.mxu0 0.0
        %499 = vmatprep.subr.mxu0 0.0
        %500 = vmatpush1.msra.mxu0 %v463
        %501 = vmatprep.subr.mxu0 0.0
        %502 = vmatpush1.msra.mxu0 %v467
        %503 = vmatprep.subr.mxu0 0.0
        %504 = vmatpush1.msra.mxu0 %v466
        %505 = vmatprep.subr.mxu0 0.0
        %506 = vmatpush1.msra.mxu0 %v465
        %507 = vmatprep.subr.mxu0 0.0
        %508 = vmatpush2.msra.mxu0 0.0
        %509 = vmatprep.subr.mxu0 0.0
        %510 = vmatpush2.msra.mxu0 0.0
        %511 = vmatprep.subr.mxu0 0.0
        %512 = vmatpush2.msra.mxu0 0.0
        %513 = vmatprep.subr.mxu0 0.0
        %514 = vmatpush2.msra.mxu0 0.0
        %515 = vmatprep.subr.mxu0 0.0
        %516 = vmatpush2.msra.mxu0 0.0
        %517 = vmatprep.subr.mxu0 0.0
        %518 = vmatpush2.msra.mxu0 0.0
        %519 = vmatprep.subr.mxu0 0.0
        %520 = vmatpush2.msra.mxu0 0.0
        %521 = vmatprep.subr.mxu0 0.0
        %522 = vmatpush2.msra.mxu0 0.0
        %523 = vmatprep.subr.mxu0 0.0
        %524 = vmatpush2.msra.mxu0 0.0
        %525 = vmatprep.subr.mxu0 0.0
        %526 = vmatpush2.msra.mxu0 0.0
        %527 = vmatprep.subr.mxu0 0.0
        %528 = vmatpush2.msra.mxu0 0.0
        %529 = vmatprep.subr.mxu0 0.0
        %530 = vmatpush2.msra.mxu0 0.0
        %531 = vmatprep.subr.mxu0 0.0
        %532 = vmatpush2.msra.mxu0 0.0
        %533 = vmatprep.subr.mxu0 0.0
        %534 = vmatpush2.msra.mxu0 0.0
        %535 = vmatprep.subr.mxu0 0.0
        %536 = vmatpush2.msra.mxu0 0.0
        %537 = vmatprep.subr.mxu0 0.0
        %538 = vmatpush2.msra.mxu0 0.0
        %539 = vmatprep.mubr.f32.mxu0 0.0
        %540 = vmatmul.mubr.f32.gmra.mxu0 %v473
        %v541 = vpop.f32.mrf.mxu0
        %v542 = vadd.f32 0.0, %v541
        %v543 = vpop.f32.mrf.mxu0
        %544 = vdwg.mxu0
        %v545 = vxor.u32 %v542, 2147483648
        %v546 = vmul.f32 %v545, 1.442695
        %v547 = vpow.pop %v546
        %v548 = vadd.f32 %v547, 1.0
        %v549 = vrcp.pop %v548
        %v550 = vmul.f32 1.0, %v549
        %v551 = vmul.f32 %v542, %v550
        %552 = vst.msk [vmem:[#allocation2 + $0x8] sm:$0xff] %vm229, %v551
        %v553 = vld [vmem:[#allocation2] sm:$0xff]
        %v554 = vld [vmem:[#allocation2 + $0x8] sm:$0xff]
        %557 = vrot.lane.b32.xlu0 %v553, 127
        %v558 = vpop.permute.xlu0 %557
        %559 = vrot.lane.b32.xlu0 %v554, 127
        %v560 = vpop.permute.xlu0 %559
        %vm561 = vcmask 1039360
        %v562 = vsel %vm561, %v558, %v560
        %563 = vrot.lane.b32.xlu0 %v553, 126
        %v564 = vpop.permute.xlu0 %563
        %565 = vrot.lane.b32.xlu0 %v554, 126
        %v566 = vpop.permute.xlu0 %565
        %v567 = vsel %vm319, %v564, %v566
        %568 = vrot.lane.b32.xlu0 %v553, 125
        %v569 = vpop.permute.xlu0 %568
        %570 = vrot.lane.b32.xlu0 %v554, 125
        %v571 = vpop.permute.xlu0 %570
        %vm572 = vcmask 1022976
        %v573 = vsel %vm572, %v569, %v571
        %574 = vrot.lane.b32.xlu0 %v553, 124
        %v575 = vpop.permute.xlu0 %574
        %576 = vrot.lane.b32.xlu0 %v554, 124
        %v577 = vpop.permute.xlu0 %576
        %v578 = vsel %vm325, %v575, %v577
        %579 = vrot.lane.b32.xlu0 %v553, 123
        %v580 = vpop.permute.xlu0 %579
        %581 = vrot.lane.b32.xlu0 %v554, 123
        %v582 = vpop.permute.xlu0 %581
        %vm583 = vcmask 1006592
        %v584 = vsel %vm583, %v580, %v582
        %585 = vrot.lane.b32.xlu0 %v553, 122
        %v586 = vpop.permute.xlu0 %585
        %587 = vrot.lane.b32.xlu0 %v554, 122
        %v588 = vpop.permute.xlu0 %587
        %vm589 = vcmask 998400
        %v590 = vsel %vm589, %v586, %v588
        %591 = vrot.lane.b32.xlu0 %v553, 121
        %v592 = vpop.permute.xlu0 %591
        %593 = vrot.lane.b32.xlu0 %v554, 121
        %v594 = vpop.permute.xlu0 %593
        %vm595 = vcmask 990208
        %v596 = vsel %vm595, %v592, %v594
        %597 = vrot.lane.b32.xlu0 %v553, 120
        %v598 = vpop.permute.xlu0 %597
        %599 = vrot.lane.b32.xlu0 %v554, 120
        %v600 = vpop.permute.xlu0 %599
        %v601 = vsel %vm446, %v598, %v600
        %602 = vrot.lane.b32.xlu0 %v553, 119
        %v603 = vpop.permute.xlu0 %602
        %604 = vrot.lane.b32.xlu0 %v554, 119
        %v605 = vpop.permute.xlu0 %604
        %vm606 = vcmask 973824
        %v607 = vsel %vm606, %v603, %v605
        %608 = vrot.lane.b32.xlu0 %v553, 118
        %v609 = vpop.permute.xlu0 %608
        %610 = vrot.lane.b32.xlu0 %v554, 118
        %v611 = vpop.permute.xlu0 %610
        %vm612 = vcmask 965632
        %v613 = vsel %vm612, %v609, %v611
        %614 = vrot.lane.b32.xlu0 %v553, 117
        %v615 = vpop.permute.xlu0 %614
        %616 = vrot.lane.b32.xlu0 %v554, 117
        %v617 = vpop.permute.xlu0 %616
        %vm618 = vcmask 957440
        %v619 = vsel %vm618, %v615, %v617
        %620 = vrot.lane.b32.xlu0 %v553, 116
        %v621 = vpop.permute.xlu0 %620
        %622 = vrot.lane.b32.xlu0 %v554, 116
        %v623 = vpop.permute.xlu0 %622
        %vm624 = vcmask 949248
        %v625 = vsel %vm624, %v621, %v623
        %626 = vrot.lane.b32.xlu0 %v553, 115
        %v627 = vpop.permute.xlu0 %626
        %628 = vrot.lane.b32.xlu0 %v554, 115
        %v629 = vpop.permute.xlu0 %628
        %vm630 = vcmask 941056
        %v631 = vsel %vm630, %v627, %v629
        %632 = vrot.lane.b32.xlu0 %v553, 114
        %v633 = vpop.permute.xlu0 %632
        %634 = vrot.lane.b32.xlu0 %v554, 114
        %v635 = vpop.permute.xlu0 %634
        %vm636 = vcmask 932864
        %v637 = vsel %vm636, %v633, %v635
        %638 = vrot.lane.b32.xlu0 %v554, 113
        %v639 = vpop.permute.xlu0 %638
        %640 = vrot.lane.b32.xlu0 %v553, 15
        %v641 = vpop.permute.xlu0 %640
        %642 = vrot.lane.b32.xlu0 %v554, 15
        %v643 = vpop.permute.xlu0 %642
        %644 = vrot.lane.b32.xlu0 %v562, 15
        %v645 = vpop.permute.xlu0 %644
        %646 = vrot.lane.b32.xlu0 %v560, 15
        %v647 = vpop.permute.xlu0 %646
        %648 = vrot.lane.b32.xlu0 %v567, 15
        %v649 = vpop.permute.xlu0 %648
        %650 = vrot.lane.b32.xlu0 %v566, 15
        %v651 = vpop.permute.xlu0 %650
        %652 = vrot.lane.b32.xlu0 %v573, 15
        %v653 = vpop.permute.xlu0 %652
        %654 = vrot.lane.b32.xlu0 %v571, 15
        %v655 = vpop.permute.xlu0 %654
        %656 = vrot.lane.b32.xlu0 %v578, 15
        %v657 = vpop.permute.xlu0 %656
        %658 = vrot.lane.b32.xlu0 %v577, 15
        %v659 = vpop.permute.xlu0 %658
        %660 = vrot.lane.b32.xlu0 %v584, 15
        %v661 = vpop.permute.xlu0 %660
        %662 = vrot.lane.b32.xlu0 %v582, 15
        %v663 = vpop.permute.xlu0 %662
        %664 = vrot.lane.b32.xlu0 %v590, 15
        %v665 = vpop.permute.xlu0 %664
        %666 = vrot.lane.b32.xlu0 %v588, 15
        %v667 = vpop.permute.xlu0 %666
        %668 = vrot.lane.b32.xlu0 %v596, 15
        %v669 = vpop.permute.xlu0 %668
        %670 = vrot.lane.b32.xlu0 %v594, 15
        %v671 = vpop.permute.xlu0 %670
        %672 = vrot.lane.b32.xlu0 %v601, 15
        %v673 = vpop.permute.xlu0 %672
        %674 = vrot.lane.b32.xlu0 %v600, 15
        %v675 = vpop.permute.xlu0 %674
        %676 = vrot.lane.b32.xlu0 %v607, 15
        %v677 = vpop.permute.xlu0 %676
        %678 = vrot.lane.b32.xlu0 %v605, 15
        %v679 = vpop.permute.xlu0 %678
        %680 = vrot.lane.b32.xlu0 %v613, 15
        %v681 = vpop.permute.xlu0 %680
        %682 = vrot.lane.b32.xlu0 %v611, 15
        %v683 = vpop.permute.xlu0 %682
        %684 = vrot.lane.b32.xlu0 %v619, 15
        %v685 = vpop.permute.xlu0 %684
        %686 = vrot.lane.b32.xlu0 %v617, 15
        %v687 = vpop.permute.xlu0 %686
        %688 = vrot.lane.b32.xlu0 %v625, 15
        %v689 = vpop.permute.xlu0 %688
        %690 = vrot.lane.b32.xlu0 %v623, 15
        %v691 = vpop.permute.xlu0 %690
        %692 = vrot.lane.b32.xlu0 %v631, 15
        %v693 = vpop.permute.xlu0 %692
        %694 = vrot.lane.b32.xlu0 %v629, 15
        %v695 = vpop.permute.xlu0 %694
        %696 = vrot.lane.b32.xlu0 %v637, 15
        %v697 = vpop.permute.xlu0 %696
        %698 = vrot.lane.b32.xlu0 %v635, 15
        %v699 = vpop.permute.xlu0 %698
        %700 = vrot.lane.b32.xlu0 %v639, 15
        %v701 = vpop.permute.xlu0 %700
        %vm702 = vcmask 121856
        %v703 = vsel %vm702, %v641, %v643
        %v704 = vsel %vm702, %v645, %v647
        %v705 = vsel %vm702, %v649, %v651
        %v706 = vsel %vm702, %v653, %v655
        %v707 = vsel %vm702, %v657, %v659
        %v708 = vsel %vm702, %v661, %v663
        %v709 = vsel %vm702, %v665, %v667
        %v710 = vsel %vm702, %v669, %v671
        %v711 = vsel %vm702, %v673, %v675
        %v712 = vsel %vm702, %v677, %v679
        %v713 = vsel %vm702, %v681, %v683
        %v714 = vsel %vm702, %v685, %v687
        %v715 = vsel %vm702, %v689, %v691
        %v716 = vsel %vm702, %v693, %v695
        %v717 = vsel %vm702, %v697, %v699
        %734 = vmatprep.subr.mxu0 0.0
        %735 = vmatpush1.msra.mxu0 %v701
        %736 = vmatprep.subr.mxu0 0.0
        %737 = vmatpush1.msra.mxu0 %v717
        %738 = vmatprep.subr.mxu0 0.0
        %739 = vmatpush1.msra.mxu0 %v716
        %740 = vmatprep.subr.mxu0 0.0
        %741 = vmatpush1.msra.mxu0 %v715
        %742 = vmatprep.subr.mxu0 0.0
        %743 = vmatpush1.msra.mxu0 %v714
        %744 = vmatprep.subr.mxu0 0.0
        %745 = vmatpush1.msra.mxu0 %v713
        %746 = vmatprep.subr.mxu0 0.0
        %747 = vmatpush1.msra.mxu0 %v712
        %748 = vmatprep.subr.mxu0 0.0
        %749 = vmatpush1.msra.mxu0 %v711
        %750 = vmatprep.subr.mxu0 0.0
        %751 = vmatpush1.msra.mxu0 %v710
        %752 = vmatprep.subr.mxu0 0.0
        %753 = vmatpush1.msra.mxu0 %v709
        %754 = vmatprep.subr.mxu0 0.0
        %755 = vmatpush1.msra.mxu0 %v708
        %756 = vmatprep.subr.mxu0 0.0
        %757 = vmatpush1.msra.mxu0 %v707
        %758 = vmatprep.subr.mxu0 0.0
        %759 = vmatpush1.msra.mxu0 %v706
        %760 = vmatprep.subr.mxu0 0.0
        %761 = vmatpush1.msra.mxu0 %v705
        %762 = vmatprep.subr.mxu0 0.0
        %763 = vmatpush1.msra.mxu0 %v704
        %764 = vmatprep.subr.mxu0 0.0
        %765 = vmatpush1.msra.mxu0 %v703
        %766 = vmatprep.subr.mxu0 0.0
        %767 = vmatpush2.msra.mxu0 0.0
        %768 = vmatprep.subr.mxu0 0.0
        %769 = vmatpush2.msra.mxu0 0.0
        %770 = vmatprep.subr.mxu0 0.0
        %771 = vmatpush2.msra.mxu0 0.0
        %772 = vmatprep.subr.mxu0 0.0
        %773 = vmatpush2.msra.mxu0 0.0
        %774 = vmatprep.subr.mxu0 0.0
        %775 = vmatpush2.msra.mxu0 0.0
        %776 = vmatprep.subr.mxu0 0.0
        %777 = vmatpush2.msra.mxu0 0.0
        %778 = vmatprep.subr.mxu0 0.0
        %779 = vmatpush2.msra.mxu0 0.0
        %780 = vmatprep.subr.mxu0 0.0
        %781 = vmatpush2.msra.mxu0 0.0
        %782 = vmatprep.subr.mxu0 0.0
        %783 = vmatpush2.msra.mxu0 0.0
        %784 = vmatprep.subr.mxu0 0.0
        %785 = vmatpush2.msra.mxu0 0.0
        %786 = vmatprep.subr.mxu0 0.0
        %787 = vmatpush2.msra.mxu0 0.0
        %788 = vmatprep.subr.mxu0 0.0
        %789 = vmatpush2.msra.mxu0 0.0
        %790 = vmatprep.subr.mxu0 0.0
        %791 = vmatpush2.msra.mxu0 0.0
        %792 = vmatprep.subr.mxu0 0.0
        %793 = vmatpush2.msra.mxu0 0.0
        %794 = vmatprep.subr.mxu0 0.0
        %795 = vmatpush2.msra.mxu0 0.0
        %796 = vmatprep.subr.mxu0 0.0
        %797 = vmatpush2.msra.mxu0 0.0
        %798 = vmatprep.mubr.f32.mxu0 0.0
        %799 = vmatmul.mubr.f32.gmra.mxu0 %v226
        %v800 = vpop.f32.mrf.mxu0
        %v801 = vadd.f32 0.0, %v800
        %v802 = vpop.f32.mrf.mxu0
        %803 = vdwg.mxu0
        %v804 = vtanh.pop %v801
        %vm805 = vcmask 122880
        %806 = vst.msk [vmem:[%s216] sm:$0x1] %vm805, %v804
        %s807 = sand.u32 %s137, 1
        %s808 = scalar_lea.sflag [#allocation4], %s807
        %s809 = sand.u32 %s137, 1
        %s810 = scalar_lea.vmem [#allocation3], %s809
        // Predicated region
        $region41: #{scale_up_pallas.1} parent=39 // pred_check
          %p811 = pneg %p147
        $region42: #{scale_up_pallas.1} parent=39 // pred_check_branch
          %813 = sbr.rel (%p811) target = $region44
        $region43: #{scale_up_pallas.1} parent=39 // pred_region
          %s815 = ssub.s32 16, 16
          %816 = vsyncadd %s808, %s815
          %s817 = smul.addr %s19, 16
          %s818 = scalar_lea.hbm %s5, %s817
          %s820 = sshll.u32 %s810, 4
          %s821 = int_to_ptr.vmem [resolvable:$true] %s820
          %823 = dma.vmem_to_hbm [thread:$0]  %s821, 16, %s818, %s808
        $region44: #{scale_up_pallas.1} parent=39 // pred_fallthru
          _
      $region40: #{scale_up_pallas.1} parent=5 // pred_fallthru
        _
      %p824 = scmp.le.s32.totalorder 2, %s14
      // Predicated region
      $region45: #{scale_up_pallas.1} parent=5 // pred_check
        %p825 = pneg %p824
      $region46: #{scale_up_pallas.1} parent=5 // pred_check_branch
        %827 = sbr.rel (%p825) target = $region48
      $region47: #{scale_up_pallas.1} parent=5 // pred_region
        %s828 = ssub.s32 %s14, 2
        // Predicated region
        $region49: #{scale_up_pallas.1} parent=47 // pred_check
          %p829 = pneg %p153
        $region50: #{scale_up_pallas.1} parent=47 // pred_check_branch
          %831 = sbr.rel (%p829) target = $region52
        $region51: #{scale_up_pallas.1} parent=47 // pred_region
          %s832 = sand.u32 %s138, 1
          %s833 = scalar_lea.sflag [#allocation4], %s832
          %s834 = sand.u32 %s138, 1
          %s835 = scalar_lea.vmem [#allocation3], %s834
          %836 = dma.done %s833, 16
        $region52: #{scale_up_pallas.1} parent=47 // pred_fallthru
          _
      $region48: #{scale_up_pallas.1} parent=5 // pred_fallthru
        _
    $region6: #{scale_up_pallas.1} parent=1 // loop_footer
      %s18 = sadd.s32 1, %s14
    $region7: #{scale_up_pallas.1} parent=1 // loop_footer_branch
      %13 = sbr.rel target = $region3
    $region8: #{scale_up_pallas.1} parent=1 // loop_exit
      _
    %837 = vsyncpa [#allocation4], 1
    %s838 = scalar_lea.sflag [#allocation4], 1
    %839 = vsyncpa %s838, 1

</llo_original>
